<compile_context>
chip_gen: v6e
topology: v6e:2x2x1
jax: 0.10.0
libtpu: 0.0.40
codegen_flags: <defaults>
</compile_context>

<pallas_src>
import functools

import jax
import jax.numpy as jnp
import numpy as np
from jax.experimental import pallas as pl
from jax.experimental.pallas import tpu as pltpu

SEED = 47
LANE = 128


def _round_up(n, m):
    return ((n + m - 1) // m) * m


# ----------------------------------------------------------------------------
# Pallas kernel: fused 4-layer MLP + sigma + Normal sample, single output slab
# ----------------------------------------------------------------------------
def _actor_ppo_kernel(x_ref,                          # (B, S)        f32
                      w1_ref, b1_ref,                 # (S, H1) bf16 / (1, H1) f32
                      w2_ref, b2_ref,
                      w3_ref, b3_ref,
                      wmu_ref, bmu_ref,               # padded to A_pad lanes
                      log_sigma_ref,                  # (1, A_pad)    f32
                      eps_ref,                        # (B, A_pad)    f32  ~ N(0,1)
                      out_ref):                       # (3, B, A_pad) f32
    def dense(h, w_ref, b_ref):
        # bf16 operands on the MXU, f32 accumulation; bias-add stays f32 on the VPU
        # (keeps the elementwise path valid on v5e which has no bf16 VPU/EUP).
        return jnp.dot(h.astype(jnp.bfloat16), w_ref[...],
                       preferred_element_type=jnp.float32) + b_ref[...]

    h = jnp.maximum(dense(x_ref[...], w1_ref, b1_ref), 0.0)   # Linear + ReLU
    h = jnp.maximum(dense(h, w2_ref, b2_ref), 0.0)            # Linear + ReLU
    h = jnp.maximum(dense(h, w3_ref, b3_ref), 0.0)            # Linear + ReLU
    mu = jnp.tanh(dense(h, wmu_ref, bmu_ref))                 # Linear + tanh head

    # sigma = (exp(tanh(log_sigma)) - 0.3) / 2, broadcast over the batch so the
    # store is a full lane-dense (B, A_pad) write (no masked partial store).
    sigma = (jnp.exp(jnp.tanh(log_sigma_ref[...])) - 0.3) * 0.5
    sigma_b = jnp.broadcast_to(sigma, mu.shape)

    # Normal(mu, sigma).sample() == mu + sigma * eps
    out_ref[0] = mu + sigma_b * eps_ref[...]   # action
    out_ref[1] = mu                            # mu
    out_ref[2] = sigma_b                       # sigma (pre-broadcast)


# ----------------------------------------------------------------------------
# Wrapper: single grid-less pallas_call, everything VMEM-resident
# ----------------------------------------------------------------------------
def _actor_ppo_pallas(x, params, eps, action_size):
    B, S = x.shape
    H1 = params["w1"].shape[1]
    H2 = params["w2"].shape[1]
    H3 = params["w3"].shape[1]
    A_pad = params["wmu"].shape[1]

    vmem = pl.BlockSpec(memory_space=pltpu.MemorySpace.VMEM)

    operands = (
        x,
        params["w1"], params["b1"],
        params["w2"], params["b2"],
        params["w3"], params["b3"],
        params["wmu"], params["bmu"],
        params["log_sigma"],
        eps,
    )

    # Honest advisory cost: head flops at the real action_size, transcendentals
    # = tanh head (B*A_pad) + tanh/exp of log_sigma (2*A_pad).
    flops = 2 * B * (S * H1 + H1 * H2 + H2 * H3 + H3 * action_size)
    transcendentals = B * A_pad + 2 * A_pad
    in_bytes = sum(int(np.prod(o.shape)) * o.dtype.itemsize for o in operands)
    out_bytes = 3 * B * A_pad * 4
    cost = pl.CostEstimate(flops=flops,
                           transcendentals=transcendentals,
                           bytes_accessed=in_bytes + out_bytes)

    # Single lane-dense output slab: (3, B, A_pad) = [action; mu; sigma].
    return pl.pallas_call(
        _actor_ppo_kernel,
        out_shape=jax.ShapeDtypeStruct((3, B, A_pad), jnp.float32),
        in_specs=[vmem] * len(operands),
        out_specs=vmem,
        cost_estimate=cost,
    )(*operands)


@functools.partial(jax.jit, static_argnames=("action_size",))
def actor_ppo_forward_padded(x, params, key, *, action_size):
    """Returns the padded slab (3, B, A_pad) = [action; mu; sigma].

    The [:, :, :action_size] slice is intentionally NOT taken here -- it is
    deferred to the downstream consumer (PPO loss) so it can fuse there.
    The PRNG key must be folded with a step counter by the caller so each
    invocation draws fresh exploration noise.
    """
    # TODO(synk): torch.distributions.Normal object itself has no Pallas
    # equivalent; the kernel returns its parameters (mu, sigma) plus the sample.
    B = x.shape[0]
    A_pad = params["wmu"].shape[1]
    eps = jax.random.normal(key, (B, A_pad), jnp.float32)
    return _actor_ppo_pallas(x, params, eps, action_size)


def split_actor_outputs(slab, action_size):
    """Downstream helper: split the padded slab into (action, mu, sigma)."""
    action = slab[0, :, :action_size]
    mu = slab[1, :, :action_size]
    sigma = slab[2, :, :action_size]
    return action, mu, sigma


# ----------------------------------------------------------------------------
# Parameter init (mimics PyTorch nn.Linear default uniform init); weights bf16,
# action head zero-padded to a lane-dense (multiple-of-128) width.
# ----------------------------------------------------------------------------
def init_params(key, state_size, action_size, size1=256, size2=256, size3=128):
    a_pad = max(LANE, _round_up(action_size, LANE))

    def linear(key, fan_in, fan_out):
        kw, kb = jax.random.split(key)
        lim = 1.0 / float(np.sqrt(fan_in))
        w = jax.random.uniform(kw, (fan_in, fan_out), jnp.float32, -lim, lim)
        b = jax.random.uniform(kb, (1, fan_out), jnp.float32, -lim, lim)
        return w, b

    k1, k2, k3, k4 = jax.random.split(key, 4)
    w1, b1 = linear(k1, state_size, size1)
    w2, b2 = linear(k2, size1, size2)
    w3, b3 = linear(k3, size2, size3)
    wmu, bmu = linear(k4, size3, action_size)

    # zero-pad the narrow head to 128 lanes; padded lanes are sliced off downstream.
    wmu_p = jnp.zeros((size3, a_pad), jnp.float32).at[:, :action_size].set(wmu)
    bmu_p = jnp.zeros((1, a_pad), jnp.float32).at[:, :action_size].set(bmu)
    log_sigma = jnp.zeros((1, a_pad), jnp.float32)   # nn.Parameter(torch.zeros(action_size))

    return dict(
        w1=w1.astype(jnp.bfloat16), b1=b1,
        w2=w2.astype(jnp.bfloat16), b2=b2,
        w3=w3.astype(jnp.bfloat16), b3=b3,
        wmu=wmu_p.astype(jnp.bfloat16), bmu=bmu_p,
        log_sigma=log_sigma,
    )


# ----------------------------------------------------------------------------
# Plain-JAX reference (same bf16 weights, f32 accumulation)
# ----------------------------------------------------------------------------
def _reference(x, params, eps, action_size):
    def dense(h, w, b):
        return jnp.dot(h.astype(jnp.bfloat16), w,
                       preferred_element_type=jnp.float32) + b

    h = jnp.maximum(dense(x, params["w1"], params["b1"]), 0.0)
    h = jnp.maximum(dense(h, params["w2"], params["b2"]), 0.0)
    h = jnp.maximum(dense(h, params["w3"], params["b3"]), 0.0)
    mu_p = jnp.tanh(dense(h, params["wmu"], params["bmu"]))
    sigma_p = (jnp.exp(jnp.tanh(params["log_sigma"])) - 0.3) * 0.5
    sigma_p = jnp.broadcast_to(sigma_p, mu_p.shape)
    action_p = mu_p + sigma_p * eps
    sl = slice(None, action_size)
    return action_p[:, sl], mu_p[:, sl], sigma_p[:, sl]


if __name__ == "__main__":
    key = jax.random.PRNGKey(0)
    k_param, k_x = jax.random.split(key)

    state_size, action_size, batch = 32, 4, 8
    params = init_params(k_param, state_size, action_size)
    x = jax.random.normal(k_x, (batch, state_size), jnp.float32)

    # Per-step exploration key: fold the PPO step counter into the module seed.
    step = 0
    sample_key = jax.random.fold_in(jax.random.PRNGKey(SEED), step)

    slab = actor_ppo_forward_padded(x, params, sample_key, action_size=action_size)
    jax.block_until_ready(slab)

    action, mu, sigma = split_actor_outputs(slab, action_size)
    assert action.shape == (batch, action_size)
    assert mu.shape == (batch, action_size)
    assert sigma.shape == (batch, action_size)
    assert bool(jnp.all(jnp.isfinite(action)))

    # Reference check (re-derive the same eps from the same key).
    a_pad = params["wmu"].shape[1]
    eps = jax.random.normal(sample_key, (batch, a_pad), jnp.float32)
    action_ref, mu_ref, sigma_ref = _reference(x, params, eps, action_size)
    np.testing.assert_allclose(np.asarray(mu), np.asarray(mu_ref), atol=2e-2, rtol=2e-2)
    np.testing.assert_allclose(np.asarray(sigma), np.asarray(sigma_ref), atol=1e-4)
    np.testing.assert_allclose(np.asarray(action), np.asarray(action_ref), atol=2e-2, rtol=2e-2)

    print("KERNEL_OK")
</pallas_src>

<mosaic_0001>
module attributes {stable_mosaic.version = 11 : i64} {
  func.func @_actor_ppo_kernel(%arg0: memref<8x32xf32, #tpu.memory_space<vmem>>, %arg1: memref<32x256xbf16, #tpu.memory_space<vmem>>, %arg2: memref<1x256xf32, #tpu.memory_space<vmem>>, %arg3: memref<256x256xbf16, #tpu.memory_space<vmem>>, %arg4: memref<1x256xf32, #tpu.memory_space<vmem>>, %arg5: memref<256x128xbf16, #tpu.memory_space<vmem>>, %arg6: memref<1x128xf32, #tpu.memory_space<vmem>>, %arg7: memref<128x128xbf16, #tpu.memory_space<vmem>>, %arg8: memref<1x128xf32, #tpu.memory_space<vmem>>, %arg9: memref<1x128xf32, #tpu.memory_space<vmem>>, %arg10: memref<8x128xf32, #tpu.memory_space<vmem>>, %arg11: memref<3x8x128xf32, #tpu.memory_space<vmem>>) attributes {dimension_semantics = [], scalar_prefetch = 0 : i64, scratch_operands = 0 : i64, tpu.core_type = #tpu.core_type<tc>} {
    %c0 = arith.constant 0 : index
    %c0_0 = arith.constant 0 : index
    %0 = vector.load %arg0[%c0, %c0_0] : memref<8x32xf32, #tpu.memory_space<vmem>>, vector<8x32xf32>
    %1 = arith.truncf %0 : vector<8x32xf32> to vector<8x32xbf16>
    %c0_1 = arith.constant 0 : index
    %c0_2 = arith.constant 0 : index
    %2 = vector.load %arg1[%c0_1, %c0_2] : memref<32x256xbf16, #tpu.memory_space<vmem>>, vector<32x256xbf16>
    %cst = arith.constant dense<0.000000e+00> : vector<8x256xf32>
    %3 = tpu.matmul %1, %2, %cst {dimension_numbers = #tpu.dot_dimension_numbers<[1], [0], [0], [1], [0, 0, 1, 1], [], []>} : vector<8x32xbf16>, vector<32x256xbf16>, vector<8x256xf32> -> vector<8x256xf32>
    %c0_3 = arith.constant 0 : index
    %c0_4 = arith.constant 0 : index
    %4 = vector.load %arg2[%c0_3, %c0_4] : memref<1x256xf32, #tpu.memory_space<vmem>>, vector<1x256xf32>
    %5 = vector.broadcast %4 : vector<1x256xf32> to vector<8x256xf32>
    %6 = arith.addf %3, %5 : vector<8x256xf32>
    %cst_5 = arith.constant 0.000000e+00 : f32
    %7 = vector.broadcast %cst_5 : f32 to vector<8x256xf32>
    %8 = arith.maximumf %6, %7 : vector<8x256xf32>
    %9 = arith.truncf %8 : vector<8x256xf32> to vector<8x256xbf16>
    %c0_6 = arith.constant 0 : index
    %c0_7 = arith.constant 0 : index
    %10 = vector.load %arg3[%c0_6, %c0_7] : memref<256x256xbf16, #tpu.memory_space<vmem>>, vector<256x256xbf16>
    %cst_8 = arith.constant dense<0.000000e+00> : vector<8x256xf32>
    %11 = tpu.matmul %9, %10, %cst_8 {dimension_numbers = #tpu.dot_dimension_numbers<[1], [0], [0], [1], [0, 0, 1, 1], [], []>} : vector<8x256xbf16>, vector<256x256xbf16>, vector<8x256xf32> -> vector<8x256xf32>
    %c0_9 = arith.constant 0 : index
    %c0_10 = arith.constant 0 : index
    %12 = vector.load %arg4[%c0_9, %c0_10] : memref<1x256xf32, #tpu.memory_space<vmem>>, vector<1x256xf32>
    %13 = vector.broadcast %12 : vector<1x256xf32> to vector<8x256xf32>
    %14 = arith.addf %11, %13 : vector<8x256xf32>
    %cst_11 = arith.constant 0.000000e+00 : f32
    %15 = vector.broadcast %cst_11 : f32 to vector<8x256xf32>
    %16 = arith.maximumf %14, %15 : vector<8x256xf32>
    %17 = arith.truncf %16 : vector<8x256xf32> to vector<8x256xbf16>
    %c0_12 = arith.constant 0 : index
    %c0_13 = arith.constant 0 : index
    %18 = vector.load %arg5[%c0_12, %c0_13] : memref<256x128xbf16, #tpu.memory_space<vmem>>, vector<256x128xbf16>
    %cst_14 = arith.constant dense<0.000000e+00> : vector<8x128xf32>
    %19 = tpu.matmul %17, %18, %cst_14 {dimension_numbers = #tpu.dot_dimension_numbers<[1], [0], [0], [1], [0, 0, 1, 1], [], []>} : vector<8x256xbf16>, vector<256x128xbf16>, vector<8x128xf32> -> vector<8x128xf32>
    %c0_15 = arith.constant 0 : index
    %c0_16 = arith.constant 0 : index
    %20 = vector.load %arg6[%c0_15, %c0_16] : memref<1x128xf32, #tpu.memory_space<vmem>>, vector<1x128xf32>
    %21 = vector.broadcast %20 : vector<1x128xf32> to vector<8x128xf32>
    %22 = arith.addf %19, %21 : vector<8x128xf32>
    %cst_17 = arith.constant 0.000000e+00 : f32
    %23 = vector.broadcast %cst_17 : f32 to vector<8x128xf32>
    %24 = arith.maximumf %22, %23 : vector<8x128xf32>
    %25 = arith.truncf %24 : vector<8x128xf32> to vector<8x128xbf16>
    %c0_18 = arith.constant 0 : index
    %c0_19 = arith.constant 0 : index
    %26 = vector.load %arg7[%c0_18, %c0_19] : memref<128x128xbf16, #tpu.memory_space<vmem>>, vector<128x128xbf16>
    %cst_20 = arith.constant dense<0.000000e+00> : vector<8x128xf32>
    %27 = tpu.matmul %25, %26, %cst_20 {dimension_numbers = #tpu.dot_dimension_numbers<[1], [0], [0], [1], [0, 0, 1, 1], [], []>} : vector<8x128xbf16>, vector<128x128xbf16>, vector<8x128xf32> -> vector<8x128xf32>
    %c0_21 = arith.constant 0 : index
    %c0_22 = arith.constant 0 : index
    %28 = vector.load %arg8[%c0_21, %c0_22] : memref<1x128xf32, #tpu.memory_space<vmem>>, vector<1x128xf32>
    %29 = vector.broadcast %28 : vector<1x128xf32> to vector<8x128xf32>
    %30 = arith.addf %27, %29 : vector<8x128xf32>
    %31 = math.tanh %30 : vector<8x128xf32>
    %c0_23 = arith.constant 0 : index
    %c0_24 = arith.constant 0 : index
    %32 = vector.load %arg9[%c0_23, %c0_24] : memref<1x128xf32, #tpu.memory_space<vmem>>, vector<1x128xf32>
    %33 = math.tanh %32 : vector<1x128xf32>
    %34 = math.exp %33 : vector<1x128xf32>
    %cst_25 = arith.constant 3.000000e-01 : f32
    %35 = vector.broadcast %cst_25 : f32 to vector<1x128xf32>
    %36 = arith.subf %34, %35 : vector<1x128xf32>
    %cst_26 = arith.constant 5.000000e-01 : f32
    %37 = vector.broadcast %cst_26 : f32 to vector<1x128xf32>
    %38 = arith.mulf %36, %37 : vector<1x128xf32>
    %39 = vector.shape_cast %38 : vector<1x128xf32> to vector<1x128xf32>
    %40 = vector.broadcast %39 : vector<1x128xf32> to vector<8x128xf32>
    %c0_27 = arith.constant 0 : index
    %c0_28 = arith.constant 0 : index
    %41 = vector.load %arg10[%c0_27, %c0_28] : memref<8x128xf32, #tpu.memory_space<vmem>>, vector<8x128xf32>
    %42 = arith.mulf %40, %41 : vector<8x128xf32>
    %43 = arith.addf %31, %42 : vector<8x128xf32>
    %c0_29 = arith.constant 0 : index
    %c0_30 = arith.constant 0 : index
    %c0_31 = arith.constant 0 : index
    %44 = vector.load %arg11[%c0_29, %c0_30, %c0_31] : memref<3x8x128xf32, #tpu.memory_space<vmem>>, vector<1x8x128xf32>
    %45 = vector.shape_cast %44 : vector<1x8x128xf32> to vector<8x128xf32>
    %46 = vector.shape_cast %43 : vector<8x128xf32> to vector<1x8x128xf32>
    tpu.vector_store %arg11[%c0_29, %c0_30, %c0_31], %46 {strides = array<i32>} : memref<3x8x128xf32, #tpu.memory_space<vmem>>, vector<1x8x128xf32>,
    %c1 = arith.constant 1 : index
    %c0_32 = arith.constant 0 : index
    %c0_33 = arith.constant 0 : index
    %47 = vector.load %arg11[%c1, %c0_32, %c0_33] : memref<3x8x128xf32, #tpu.memory_space<vmem>>, vector<1x8x128xf32>
    %48 = vector.shape_cast %47 : vector<1x8x128xf32> to vector<8x128xf32>
    %49 = vector.shape_cast %31 : vector<8x128xf32> to vector<1x8x128xf32>
    tpu.vector_store %arg11[%c1, %c0_32, %c0_33], %49 {strides = array<i32>} : memref<3x8x128xf32, #tpu.memory_space<vmem>>, vector<1x8x128xf32>,
    %c2 = arith.constant 2 : index
    %c0_34 = arith.constant 0 : index
    %c0_35 = arith.constant 0 : index
    %50 = vector.load %arg11[%c2, %c0_34, %c0_35] : memref<3x8x128xf32, #tpu.memory_space<vmem>>, vector<1x8x128xf32>
    %51 = vector.shape_cast %50 : vector<1x8x128xf32> to vector<8x128xf32>
    %52 = vector.shape_cast %40 : vector<8x128xf32> to vector<1x8x128xf32>
    tpu.vector_store %arg11[%c2, %c0_34, %c0_35], %52 {strides = array<i32>} : memref<3x8x128xf32, #tpu.memory_space<vmem>>, vector<1x8x128xf32>,
    return
  }
}

</mosaic_0001>

<llo_original>
// kernel: actor_ppo_forward_padded.1
$region0: #{actor_ppo_forward_padded.1}
  #allocation0 [shape = 'u32[]', space=smem, size = 0x4, offset = 0x4, fixed_abs, tag = 'smem constant byte address 0x4 - core index']
  #allocation1 [shape = 'u32[144,128]{1,0:T(1,128)}', space=vmem, size = 0x12000, scoped, tag = 'internal scratch']
  %s0 = inlined_call_operand.vmem [shape: f32[8,32], index: 0, kind: input, shape index: {}]
  %s1 = inlined_call_operand.vmem [shape: bf16[32,256], index: 1, kind: input, shape index: {}]
  %s2 = inlined_call_operand.hbm [shape: f32[1,256], index: 2, kind: input, shape index: {}]
  %s3 = inlined_call_operand.hbm [shape: bf16[256,256], index: 3, kind: input, shape index: {}]
  %s4 = inlined_call_operand.vmem [shape: f32[1,256], index: 4, kind: input, shape index: {}]
  %s5 = inlined_call_operand.hbm [shape: bf16[256,128], index: 5, kind: input, shape index: {}]
  %s6 = inlined_call_operand.vmem [shape: f32[1,128], index: 6, kind: input, shape index: {}]
  %s7 = inlined_call_operand.hbm [shape: bf16[128,128], index: 7, kind: input, shape index: {}]
  %s8 = inlined_call_operand.vmem [shape: f32[1,128], index: 8, kind: input, shape index: {}]
  %s9 = inlined_call_operand.vmem [shape: f32[1,128], index: 9, kind: input, shape index: {}]
  %s10 = inlined_call_operand.vmem [shape: f32[8,128], index: 10, kind: input, shape index: {}]
  %s11 = inlined_call_operand.hbm [shape: f32[3,8,128], index: 11, kind: output, shape index: {}]
  %s12 = sld [smem:[#allocation0]]
  $region70: #{actor_ppo_forward_padded.1} parent=0
    _
  %s14 = ssub.s32 1, %s12
  %s15 = scalar_select 0, %s14, %s12
  $region1: #{actor_ppo_forward_padded.1} parent=0
    #allocation2 [shape = 'u8[1024]{0}', space=vmem, size = 0x400, scoped, tag = 'input window, operand 2, single buffered']
    #allocation3 [shape = 's32[1]{0}', space=sflag, size = 0x4, scoped, tag = 'scoped memory for actor_ppo_forward_padded.1']
    #allocation4 [shape = 's32[1]{0}', space=sflag, size = 0x4, scoped, tag = 'scoped memory for actor_ppo_forward_padded.1']
    #allocation5 [shape = 'u8[131072]{0}', space=vmem, size = 0x20000, scoped, tag = 'input window, operand 3, single buffered']
    #allocation6 [shape = 's32[1]{0}', space=sflag, size = 0x4, scoped, tag = 'scoped memory for actor_ppo_forward_padded.1']
    #allocation7 [shape = 'u8[65536]{0}', space=vmem, size = 0x10000, scoped, tag = 'input window, operand 5, single buffered']
    #allocation8 [shape = 'u8[32768]{0}', space=vmem, size = 0x8000, scoped, tag = 'input window, operand 7, single buffered']
    #allocation9 [shape = 's32[1]{0}', space=sflag, size = 0x4, scoped, tag = 'scoped memory for actor_ppo_forward_padded.1']
    #allocation10 [shape = 'u8[12288]{0}', space=vmem, size = 0x3000, scoped, tag = 'output window, operand 0, single buffered']
    %16 = vsyncpa [#allocation3], 0
    %17 = vsyncpa [#allocation6], 0
    %18 = vsyncpa [#allocation9], 0
    %19 = vsyncpa [#allocation4], 0
    // Predicated region
    $region2: #{actor_ppo_forward_padded.1} parent=1 // pred_check
      _
    $region3: #{actor_ppo_forward_padded.1} parent=1 // pred_check_branch
      %21 = sbr.rel (0) target = $region5
    $region4: #{actor_ppo_forward_padded.1} parent=1 // pred_region
      _
    $region5: #{actor_ppo_forward_padded.1} parent=1 // pred_fallthru
      _
    // Predicated region
    $region6: #{actor_ppo_forward_padded.1} parent=1 // pred_check
      _
    $region7: #{actor_ppo_forward_padded.1} parent=1 // pred_check_branch
      %23 = sbr.rel (0) target = $region9
    $region8: #{actor_ppo_forward_padded.1} parent=1 // pred_region
      _
    $region9: #{actor_ppo_forward_padded.1} parent=1 // pred_fallthru
      _
    // Predicated region
    $region10: #{actor_ppo_forward_padded.1} parent=1 // pred_check
      _
    $region11: #{actor_ppo_forward_padded.1} parent=1 // pred_check_branch
      %25 = sbr.rel (0) target = $region13
    $region12: #{actor_ppo_forward_padded.1} parent=1 // pred_region
      %s27 = ssub.s32 32, 32
      %28 = vsyncadd [#allocation3], %s27
      %s30 = sshll.u32 [#allocation2], 4
      %s31 = int_to_ptr.vmem [resolvable:$true] %s30
      %33 = dma.hbm_to_vmem [thread:$0]  %s2, 32, %s31, [#allocation3]
    $region13: #{actor_ppo_forward_padded.1} parent=1 // pred_fallthru
      _
    // Predicated region
    $region14: #{actor_ppo_forward_padded.1} parent=1 // pred_check
      _
    $region15: #{actor_ppo_forward_padded.1} parent=1 // pred_check_branch
      %35 = sbr.rel (0) target = $region17
    $region16: #{actor_ppo_forward_padded.1} parent=1 // pred_region
      %s37 = ssub.s32 4096, 4096
      %38 = vsyncadd [#allocation6], %s37
      %s39 = sshll.u32 [#allocation5], 4
      %s40 = int_to_ptr.vmem [resolvable:$true] %s39
      %45 = dma.hbm_to_vmem [thread:$0]  %s3, 4096, %s40, [#allocation6], 128, 128, 8
    $region17: #{actor_ppo_forward_padded.1} parent=1 // pred_fallthru
      _
    // Predicated region
    $region18: #{actor_ppo_forward_padded.1} parent=1 // pred_check
      _
    $region19: #{actor_ppo_forward_padded.1} parent=1 // pred_check_branch
      %47 = sbr.rel (0) target = $region21
    $region20: #{actor_ppo_forward_padded.1} parent=1 // pred_region
      _
    $region21: #{actor_ppo_forward_padded.1} parent=1 // pred_fallthru
      _
    // Predicated region
    $region22: #{actor_ppo_forward_padded.1} parent=1 // pred_check
      _
    $region23: #{actor_ppo_forward_padded.1} parent=1 // pred_check_branch
      %49 = sbr.rel (0) target = $region25
    $region24: #{actor_ppo_forward_padded.1} parent=1 // pred_region
      %s51 = ssub.s32 2048, 2048
      %52 = vsyncadd [#allocation6], %s51
      %s53 = sshll.u32 [#allocation7], 4
      %s54 = int_to_ptr.vmem [resolvable:$true] %s53
      %59 = dma.hbm_to_vmem [thread:$0]  %s5, 2048, %s54, [#allocation6], 64, 64, 4
    $region25: #{actor_ppo_forward_padded.1} parent=1 // pred_fallthru
      _
    // Predicated region
    $region26: #{actor_ppo_forward_padded.1} parent=1 // pred_check
      _
    $region27: #{actor_ppo_forward_padded.1} parent=1 // pred_check_branch
      %61 = sbr.rel (0) target = $region29
    $region28: #{actor_ppo_forward_padded.1} parent=1 // pred_region
      _
    $region29: #{actor_ppo_forward_padded.1} parent=1 // pred_fallthru
      _
    // Predicated region
    $region30: #{actor_ppo_forward_padded.1} parent=1 // pred_check
      _
    $region31: #{actor_ppo_forward_padded.1} parent=1 // pred_check_branch
      %63 = sbr.rel (0) target = $region33
    $region32: #{actor_ppo_forward_padded.1} parent=1 // pred_region
      %s65 = ssub.s32 1024, 1024
      %66 = vsyncadd [#allocation9], %s65
      %s67 = sshll.u32 [#allocation8], 4
      %s68 = int_to_ptr.vmem [resolvable:$true] %s67
      %73 = dma.hbm_to_vmem [thread:$0]  %s7, 1024, %s68, [#allocation9], 64, 64, 4
    $region33: #{actor_ppo_forward_padded.1} parent=1 // pred_fallthru
      _
    // Predicated region
    $region34: #{actor_ppo_forward_padded.1} parent=1 // pred_check
      _
    $region35: #{actor_ppo_forward_padded.1} parent=1 // pred_check_branch
      %75 = sbr.rel (0) target = $region37
    $region36: #{actor_ppo_forward_padded.1} parent=1 // pred_region
      _
    $region37: #{actor_ppo_forward_padded.1} parent=1 // pred_fallthru
      _
    // Predicated region
    $region38: #{actor_ppo_forward_padded.1} parent=1 // pred_check
      _
    $region39: #{actor_ppo_forward_padded.1} parent=1 // pred_check_branch
      %77 = sbr.rel (0) target = $region41
    $region40: #{actor_ppo_forward_padded.1} parent=1 // pred_region
      _
    $region41: #{actor_ppo_forward_padded.1} parent=1 // pred_fallthru
      _
    // Predicated region
    $region42: #{actor_ppo_forward_padded.1} parent=1 // pred_check
      _
    $region43: #{actor_ppo_forward_padded.1} parent=1 // pred_check_branch
      %79 = sbr.rel (0) target = $region45
    $region44: #{actor_ppo_forward_padded.1} parent=1 // pred_region
      _
    $region45: #{actor_ppo_forward_padded.1} parent=1 // pred_fallthru
      _
    // Predicated region
    $region46: #{actor_ppo_forward_padded.1} parent=1 // pred_check
      _
    $region47: #{actor_ppo_forward_padded.1} parent=1 // pred_check_branch
      %81 = sbr.rel (0) target = $region49
    $region48: #{actor_ppo_forward_padded.1} parent=1 // pred_region
      %82 = dma.done [#allocation3], 32
    $region49: #{actor_ppo_forward_padded.1} parent=1 // pred_fallthru
      _
    // Predicated region
    $region50: #{actor_ppo_forward_padded.1} parent=1 // pred_check
      _
    $region51: #{actor_ppo_forward_padded.1} parent=1 // pred_check_branch
      %84 = sbr.rel (0) target = $region53
    $region52: #{actor_ppo_forward_padded.1} parent=1 // pred_region
      %85 = dma.done [#allocation6], 4096
    $region53: #{actor_ppo_forward_padded.1} parent=1 // pred_fallthru
      _
    // Predicated region
    $region54: #{actor_ppo_forward_padded.1} parent=1 // pred_check
      _
    $region55: #{actor_ppo_forward_padded.1} parent=1 // pred_check_branch
      %87 = sbr.rel (0) target = $region57
    $region56: #{actor_ppo_forward_padded.1} parent=1 // pred_region
      %88 = dma.done [#allocation6], 2048
    $region57: #{actor_ppo_forward_padded.1} parent=1 // pred_fallthru
      _
    // Predicated region
    $region58: #{actor_ppo_forward_padded.1} parent=1 // pred_check
      _
    $region59: #{actor_ppo_forward_padded.1} parent=1 // pred_check_branch
      %90 = sbr.rel (0) target = $region61
    $region60: #{actor_ppo_forward_padded.1} parent=1 // pred_region
      %91 = dma.done [#allocation9], 1024
    $region61: #{actor_ppo_forward_padded.1} parent=1 // pred_fallthru
      _
    %v93 = vld [vmem:[%s0] sm:$0xff]
    %v94 = vpack.c.bf16 %v93, %v93
    %v95 = vld [vmem:[%s1] sm:$0xff]
    %v96 = vld [vmem:[%s1 + $0x8] sm:$0xff]
    %v97 = vld [vmem:[%s1 + $0x10] sm:$0xff]
    %v98 = vld [vmem:[%s1 + $0x18] sm:$0xff]
    %v99 = vld [vmem:[#allocation2] sm:$0x3]
    %v101 = vlaneseq
    %v102 = vshrl.u32 %v101, 7
    %v103 = vsub.s32 0, %v102
    %v104 = vrot.slane %v99, %v103
    %v105 = vlaneseq
    %v106 = vshrl.u32 %v105, 7
    %v107 = vsub.s32 1, %v106
    %v108 = vrot.slane %v99, %v107
    %v115 = vunpack.c.l.b16 %v95
    %v116 = vunpack.c.h.b16 %v95
    %v117 = vunpack.c.l.b16 %v96
    %v118 = vunpack.c.h.b16 %v96
    %v119 = vunpack.c.l.b16 %v97
    %v120 = vunpack.c.h.b16 %v97
    %v121 = vunpack.c.l.b16 %v98
    %v122 = vunpack.c.h.b16 %v98
    %v123 = vpack.c.b16 %v117, %v115
    %v124 = vpack.c.b16 %v118, %v116
    %v125 = vpack.c.b16 %v121, %v119
    %v126 = vpack.c.b16 %v122, %v120
    %vm131 = vcmask 261120
    %v133 = vsel %vm131, %v94, 0
    %135 = vmatprep.subr.bf16.mxu0 0
    %136 = vmatpush1.bf16.msra.mxu0 0
    %137 = vmatprep.subr.bf16.mxu0 0
    %138 = vmatpush1.bf16.msra.mxu0 0
    %139 = vmatprep.subr.bf16.mxu0 0
    %140 = vmatpush1.bf16.msra.mxu0 0
    %141 = vmatprep.subr.bf16.mxu0 0
    %142 = vmatpush1.bf16.msra.mxu0 0
    %143 = vmatprep.subr.bf16.mxu0 0
    %144 = vmatpush1.bf16.msra.mxu0 0
    %145 = vmatprep.subr.bf16.mxu0 0
    %146 = vmatpush1.bf16.msra.mxu0 0
    %147 = vmatprep.subr.bf16.mxu0 %v126
    %148 = vmatpush1.bf16.msra.mxu0 %v125
    %149 = vmatprep.subr.bf16.mxu0 %v124
    %150 = vmatpush1.bf16.msra.mxu0 %v123
    %151 = vmatprep.subr.bf16.mxu0 0
    %152 = vmatpush2.bf16.msra.mxu0 0
    %153 = vmatprep.subr.bf16.mxu0 0
    %154 = vmatpush2.bf16.msra.mxu0 0
    %155 = vmatprep.subr.bf16.mxu0 0
    %156 = vmatpush2.bf16.msra.mxu0 0
    %157 = vmatprep.subr.bf16.mxu0 0
    %158 = vmatpush2.bf16.msra.mxu0 0
    %159 = vmatprep.subr.bf16.mxu0 0
    %160 = vmatpush2.bf16.msra.mxu0 0
    %161 = vmatprep.subr.bf16.mxu0 0
    %162 = vmatpush2.bf16.msra.mxu0 0
    %163 = vmatprep.subr.bf16.mxu0 0
    %164 = vmatpush2.bf16.msra.mxu0 0
    %165 = vmatprep.subr.bf16.mxu0 0
    %166 = vmatpush2.bf16.msra.mxu0 0
    %167 = vmatprep.mubr.bf16.mxu0 0
    %168 = vmatmul.mubr.bf16.gmra.mxu0 %v133
    %v169 = vpop.f32.mrf.mxu0
    %v170 = vadd.f32 %v104, %v169
    %v171 = vpop.f32.mrf.mxu0
    %v172 = vadd.f32 %v108, %v171
    %v173 = vpop.f32.mrf.mxu0
    %v174 = vpop.f32.mrf.mxu0
    %175 = vdwg.mxu0
    %v176 = vmax.f32 %v170, 0.0
    %v177 = vmax.f32 %v172, 0.0
    %v178 = vpack.c.bf16 %v176, %v176
    %v179 = vpack.c.bf16 %v177, %v177
    %v180 = vld [vmem:[#allocation5] sm:$0xff]
    %v181 = vld [vmem:[#allocation5 + $0x8] sm:$0xff]
    %v182 = vld [vmem:[#allocation5 + $0x10] sm:$0xff]
    %v183 = vld [vmem:[#allocation5 + $0x18] sm:$0xff]
    %v184 = vld [vmem:[#allocation5 + $0x20] sm:$0xff]
    %v185 = vld [vmem:[#allocation5 + $0x28] sm:$0xff]
    %v186 = vld [vmem:[#allocation5 + $0x30] sm:$0xff]
    %v187 = vld [vmem:[#allocation5 + $0x38] sm:$0xff]
    %v188 = vld [vmem:[#allocation5 + $0x40] sm:$0xff]
    %v189 = vld [vmem:[#allocation5 + $0x48] sm:$0xff]
    %v190 = vld [vmem:[#allocation5 + $0x50] sm:$0xff]
    %v191 = vld [vmem:[#allocation5 + $0x58] sm:$0xff]
    %v192 = vld [vmem:[#allocation5 + $0x60] sm:$0xff]
    %v193 = vld [vmem:[#allocation5 + $0x68] sm:$0xff]
    %v194 = vld [vmem:[#allocation5 + $0x70] sm:$0xff]
    %v195 = vld [vmem:[#allocation5 + $0x78] sm:$0xff]
    %v196 = vld [vmem:[#allocation5 + $0x80] sm:$0xff]
    %v197 = vld [vmem:[#allocation5 + $0x88] sm:$0xff]
    %v198 = vld [vmem:[#allocation5 + $0x90] sm:$0xff]
    %v199 = vld [vmem:[#allocation5 + $0x98] sm:$0xff]
    %v200 = vld [vmem:[#allocation5 + $0xa0] sm:$0xff]
    %v201 = vld [vmem:[#allocation5 + $0xa8] sm:$0xff]
    %v202 = vld [vmem:[#allocation5 + $0xb0] sm:$0xff]
    %v203 = vld [vmem:[#allocation5 + $0xb8] sm:$0xff]
    %v204 = vld [vmem:[#allocation5 + $0xc0] sm:$0xff]
    %v205 = vld [vmem:[#allocation5 + $0xc8] sm:$0xff]
    %v206 = vld [vmem:[#allocation5 + $0xd0] sm:$0xff]
    %v207 = vld [vmem:[#allocation5 + $0xd8] sm:$0xff]
    %v208 = vld [vmem:[#allocation5 + $0xe0] sm:$0xff]
    %v209 = vld [vmem:[#allocation5 + $0xe8] sm:$0xff]
    %v210 = vld [vmem:[#allocation5 + $0xf0] sm:$0xff]
    %v211 = vld [vmem:[#allocation5 + $0xf8] sm:$0xff]
    %v212 = vld [vmem:[%s4] sm:$0x3]
    %v214 = vlaneseq
    %v215 = vshrl.u32 %v214, 7
    %v216 = vsub.s32 0, %v215
    %v217 = vrot.slane %v212, %v216
    %v218 = vlaneseq
    %v219 = vshrl.u32 %v218, 7
    %v220 = vsub.s32 1, %v219
    %v221 = vrot.slane %v212, %v220
    %v256 = vunpack.c.l.b16 %v180
    %v257 = vunpack.c.h.b16 %v180
    %v258 = vunpack.c.l.b16 %v181
    %v259 = vunpack.c.h.b16 %v181
    %v260 = vunpack.c.l.b16 %v182
    %v261 = vunpack.c.h.b16 %v182
    %v262 = vunpack.c.l.b16 %v183
    %v263 = vunpack.c.h.b16 %v183
    %v264 = vunpack.c.l.b16 %v184
    %v265 = vunpack.c.h.b16 %v184
    %v266 = vunpack.c.l.b16 %v185
    %v267 = vunpack.c.h.b16 %v185
    %v268 = vunpack.c.l.b16 %v186
    %v269 = vunpack.c.h.b16 %v186
    %v270 = vunpack.c.l.b16 %v187
    %v271 = vunpack.c.h.b16 %v187
    %v272 = vunpack.c.l.b16 %v188
    %v273 = vunpack.c.h.b16 %v188
    %v274 = vunpack.c.l.b16 %v189
    %v275 = vunpack.c.h.b16 %v189
    %v276 = vunpack.c.l.b16 %v190
    %v277 = vunpack.c.h.b16 %v190
    %v278 = vunpack.c.l.b16 %v191
    %v279 = vunpack.c.h.b16 %v191
    %v280 = vunpack.c.l.b16 %v192
    %v281 = vunpack.c.h.b16 %v192
    %v282 = vunpack.c.l.b16 %v193
    %v283 = vunpack.c.h.b16 %v193
    %v284 = vunpack.c.l.b16 %v194
    %v285 = vunpack.c.h.b16 %v194
    %v286 = vunpack.c.l.b16 %v195
    %v287 = vunpack.c.h.b16 %v195
    %v288 = vunpack.c.l.b16 %v196
    %v289 = vunpack.c.h.b16 %v196
    %v290 = vunpack.c.l.b16 %v197
    %v291 = vunpack.c.h.b16 %v197
    %v292 = vunpack.c.l.b16 %v198
    %v293 = vunpack.c.h.b16 %v198
    %v294 = vunpack.c.l.b16 %v199
    %v295 = vunpack.c.h.b16 %v199
    %v296 = vunpack.c.l.b16 %v200
    %v297 = vunpack.c.h.b16 %v200
    %v298 = vunpack.c.l.b16 %v201
    %v299 = vunpack.c.h.b16 %v201
    %v300 = vunpack.c.l.b16 %v202
    %v301 = vunpack.c.h.b16 %v202
    %v302 = vunpack.c.l.b16 %v203
    %v303 = vunpack.c.h.b16 %v203
    %v304 = vunpack.c.l.b16 %v204
    %v305 = vunpack.c.h.b16 %v204
    %v306 = vunpack.c.l.b16 %v205
    %v307 = vunpack.c.h.b16 %v205
    %v308 = vunpack.c.l.b16 %v206
    %v309 = vunpack.c.h.b16 %v206
    %v310 = vunpack.c.l.b16 %v207
    %v311 = vunpack.c.h.b16 %v207
    %v312 = vunpack.c.l.b16 %v208
    %v313 = vunpack.c.h.b16 %v208
    %v314 = vunpack.c.l.b16 %v209
    %v315 = vunpack.c.h.b16 %v209
    %v316 = vunpack.c.l.b16 %v210
    %v317 = vunpack.c.h.b16 %v210
    %v318 = vunpack.c.l.b16 %v211
    %v319 = vunpack.c.h.b16 %v211
    %v320 = vpack.c.b16 %v258, %v256
    %v321 = vpack.c.b16 %v259, %v257
    %v322 = vpack.c.b16 %v262, %v260
    %v323 = vpack.c.b16 %v263, %v261
    %v324 = vpack.c.b16 %v266, %v264
    %v325 = vpack.c.b16 %v267, %v265
    %v326 = vpack.c.b16 %v270, %v268
    %v327 = vpack.c.b16 %v271, %v269
    %v328 = vpack.c.b16 %v274, %v272
    %v329 = vpack.c.b16 %v275, %v273
    %v330 = vpack.c.b16 %v278, %v276
    %v331 = vpack.c.b16 %v279, %v277
    %v332 = vpack.c.b16 %v282, %v280
    %v333 = vpack.c.b16 %v283, %v281
    %v334 = vpack.c.b16 %v286, %v284
    %v335 = vpack.c.b16 %v287, %v285
    %v336 = vpack.c.b16 %v290, %v288
    %v337 = vpack.c.b16 %v291, %v289
    %v338 = vpack.c.b16 %v294, %v292
    %v339 = vpack.c.b16 %v295, %v293
    %v340 = vpack.c.b16 %v298, %v296
    %v341 = vpack.c.b16 %v299, %v297
    %v342 = vpack.c.b16 %v302, %v300
    %v343 = vpack.c.b16 %v303, %v301
    %v344 = vpack.c.b16 %v306, %v304
    %v345 = vpack.c.b16 %v307, %v305
    %v346 = vpack.c.b16 %v310, %v308
    %v347 = vpack.c.b16 %v311, %v309
    %v348 = vpack.c.b16 %v314, %v312
    %v349 = vpack.c.b16 %v315, %v313
    %v350 = vpack.c.b16 %v318, %v316
    %v351 = vpack.c.b16 %v319, %v317
    %384 = vmatprep.subr.bf16.mxu0 %v335
    %385 = vmatpush1.bf16.msra.mxu0 %v334
    %386 = vmatprep.subr.bf16.mxu0 %v333
    %387 = vmatpush1.bf16.msra.mxu0 %v332
    %388 = vmatprep.subr.bf16.mxu0 %v331
    %389 = vmatpush1.bf16.msra.mxu0 %v330
    %390 = vmatprep.subr.bf16.mxu0 %v329
    %391 = vmatpush1.bf16.msra.mxu0 %v328
    %392 = vmatprep.subr.bf16.mxu0 %v327
    %393 = vmatpush1.bf16.msra.mxu0 %v326
    %394 = vmatprep.subr.bf16.mxu0 %v325
    %395 = vmatpush1.bf16.msra.mxu0 %v324
    %396 = vmatprep.subr.bf16.mxu0 %v323
    %397 = vmatpush1.bf16.msra.mxu0 %v322
    %398 = vmatprep.subr.bf16.mxu0 %v321
    %399 = vmatpush1.bf16.msra.mxu0 %v320
    %400 = vmatprep.subr.bf16.mxu0 %v351
    %401 = vmatpush2.bf16.msra.mxu0 %v350
    %402 = vmatprep.subr.bf16.mxu0 %v349
    %403 = vmatpush2.bf16.msra.mxu0 %v348
    %404 = vmatprep.subr.bf16.mxu0 %v347
    %405 = vmatpush2.bf16.msra.mxu0 %v346
    %406 = vmatprep.subr.bf16.mxu0 %v345
    %407 = vmatpush2.bf16.msra.mxu0 %v344
    %408 = vmatprep.subr.bf16.mxu0 %v343
    %409 = vmatpush2.bf16.msra.mxu0 %v342
    %410 = vmatprep.subr.bf16.mxu0 %v341
    %411 = vmatpush2.bf16.msra.mxu0 %v340
    %412 = vmatprep.subr.bf16.mxu0 %v339
    %413 = vmatpush2.bf16.msra.mxu0 %v338
    %414 = vmatprep.subr.bf16.mxu0 %v337
    %415 = vmatpush2.bf16.msra.mxu0 %v336
    %416 = vmatprep.mubr.bf16.mxu0 %v179
    %417 = vmatmul.mubr.bf16.gmra.mxu0 %v178
    %v418 = vpop.f32.mrf.mxu0
    %v419 = vadd.f32 %v217, %v418
    %v420 = vpop.f32.mrf.mxu0
    %v421 = vadd.f32 %v221, %v420
    %v422 = vpop.f32.mrf.mxu0
    %v423 = vpop.f32.mrf.mxu0
    %424 = vdwg.mxu0
    %v425 = vmax.f32 %v419, 0.0
    %v426 = vmax.f32 %v421, 0.0
    %v427 = vpack.c.bf16 %v425, %v425
    %v428 = vpack.c.bf16 %v426, %v426
    %v429 = vld [vmem:[#allocation7] sm:$0xf]
    %v430 = vld [vmem:[#allocation7 + $0x4] sm:$0xf]
    %v431 = vld [vmem:[#allocation7 + $0x8] sm:$0xf]
    %v432 = vld [vmem:[#allocation7 + $0xc] sm:$0xf]
    %v433 = vld [vmem:[#allocation7 + $0x10] sm:$0xf]
    %v434 = vld [vmem:[#allocation7 + $0x14] sm:$0xf]
    %v435 = vld [vmem:[#allocation7 + $0x18] sm:$0xf]
    %v436 = vld [vmem:[#allocation7 + $0x1c] sm:$0xf]
    %v437 = vld [vmem:[#allocation7 + $0x20] sm:$0xf]
    %v438 = vld [vmem:[#allocation7 + $0x24] sm:$0xf]
    %v439 = vld [vmem:[#allocation7 + $0x28] sm:$0xf]
    %v440 = vld [vmem:[#allocation7 + $0x2c] sm:$0xf]
    %v441 = vld [vmem:[#allocation7 + $0x30] sm:$0xf]
    %v442 = vld [vmem:[#allocation7 + $0x34] sm:$0xf]
    %v443 = vld [vmem:[#allocation7 + $0x38] sm:$0xf]
    %v444 = vld [vmem:[#allocation7 + $0x3c] sm:$0xf]
    %v445 = vld [vmem:[#allocation7 + $0x40] sm:$0xf]
    %v446 = vld [vmem:[#allocation7 + $0x44] sm:$0xf]
    %v447 = vld [vmem:[#allocation7 + $0x48] sm:$0xf]
    %v448 = vld [vmem:[#allocation7 + $0x4c] sm:$0xf]
    %v449 = vld [vmem:[#allocation7 + $0x50] sm:$0xf]
    %v450 = vld [vmem:[#allocation7 + $0x54] sm:$0xf]
    %v451 = vld [vmem:[#allocation7 + $0x58] sm:$0xf]
    %v452 = vld [vmem:[#allocation7 + $0x5c] sm:$0xf]
    %v453 = vld [vmem:[#allocation7 + $0x60] sm:$0xf]
    %v454 = vld [vmem:[#allocation7 + $0x64] sm:$0xf]
    %v455 = vld [vmem:[#allocation7 + $0x68] sm:$0xf]
    %v456 = vld [vmem:[#allocation7 + $0x6c] sm:$0xf]
    %v457 = vld [vmem:[#allocation7 + $0x70] sm:$0xf]
    %v458 = vld [vmem:[#allocation7 + $0x74] sm:$0xf]
    %v459 = vld [vmem:[#allocation7 + $0x78] sm:$0xf]
    %v460 = vld [vmem:[#allocation7 + $0x7c] sm:$0xf]
    %v461 = vld [vmem:[%s6] sm:$0x1]
    %v463 = vlaneseq
    %v464 = vshrl.u32 %v463, 7
    %v465 = vsub.s32 0, %v464
    %v466 = vrot.slane %v461, %v465
    %v500 = vunpack.c.l.b16 %v429
    %v501 = vunpack.c.l.b16 %v430
    %v502 = vunpack.c.l.b16 %v431
    %v503 = vunpack.c.l.b16 %v432
    %v504 = vunpack.c.l.b16 %v433
    %v505 = vunpack.c.l.b16 %v434
    %v506 = vunpack.c.l.b16 %v435
    %v507 = vunpack.c.l.b16 %v436
    %v508 = vunpack.c.l.b16 %v437
    %v509 = vunpack.c.l.b16 %v438
    %v510 = vunpack.c.l.b16 %v439
    %v511 = vunpack.c.l.b16 %v440
    %v512 = vunpack.c.l.b16 %v441
    %v513 = vunpack.c.l.b16 %v442
    %v514 = vunpack.c.l.b16 %v443
    %v515 = vunpack.c.l.b16 %v444
    %v516 = vunpack.c.l.b16 %v445
    %v517 = vunpack.c.l.b16 %v446
    %v518 = vunpack.c.l.b16 %v447
    %v519 = vunpack.c.l.b16 %v448
    %v520 = vunpack.c.l.b16 %v449
    %v521 = vunpack.c.l.b16 %v450
    %v522 = vunpack.c.l.b16 %v451
    %v523 = vunpack.c.l.b16 %v452
    %v524 = vunpack.c.l.b16 %v453
    %v525 = vunpack.c.l.b16 %v454
    %v526 = vunpack.c.l.b16 %v455
    %v527 = vunpack.c.l.b16 %v456
    %v528 = vunpack.c.l.b16 %v457
    %v529 = vunpack.c.l.b16 %v458
    %v530 = vunpack.c.l.b16 %v459
    %v531 = vunpack.c.l.b16 %v460
    %v532 = vpack.c.b16 %v501, %v500
    %v533 = vpack.c.b16 %v503, %v502
    %v534 = vpack.c.b16 %v505, %v504
    %v535 = vpack.c.b16 %v507, %v506
    %v536 = vpack.c.b16 %v509, %v508
    %v537 = vpack.c.b16 %v511, %v510
    %v538 = vpack.c.b16 %v513, %v512
    %v539 = vpack.c.b16 %v515, %v514
    %v540 = vpack.c.b16 %v517, %v516
    %v541 = vpack.c.b16 %v519, %v518
    %v542 = vpack.c.b16 %v521, %v520
    %v543 = vpack.c.b16 %v523, %v522
    %v544 = vpack.c.b16 %v525, %v524
    %v545 = vpack.c.b16 %v527, %v526
    %v546 = vpack.c.b16 %v529, %v528
    %v547 = vpack.c.b16 %v531, %v530
    %564 = vmatprep.subr.bf16.mxu0 0
    %565 = vmatpush1.bf16.msra.mxu0 %v539
    %566 = vmatprep.subr.bf16.mxu0 0
    %567 = vmatpush1.bf16.msra.mxu0 %v538
    %568 = vmatprep.subr.bf16.mxu0 0
    %569 = vmatpush1.bf16.msra.mxu0 %v537
    %570 = vmatprep.subr.bf16.mxu0 0
    %571 = vmatpush1.bf16.msra.mxu0 %v536
    %572 = vmatprep.subr.bf16.mxu0 0
    %573 = vmatpush1.bf16.msra.mxu0 %v535
    %574 = vmatprep.subr.bf16.mxu0 0
    %575 = vmatpush1.bf16.msra.mxu0 %v534
    %576 = vmatprep.subr.bf16.mxu0 0
    %577 = vmatpush1.bf16.msra.mxu0 %v533
    %578 = vmatprep.subr.bf16.mxu0 0
    %579 = vmatpush1.bf16.msra.mxu0 %v532
    %580 = vmatprep.subr.bf16.mxu0 0
    %581 = vmatpush2.bf16.msra.mxu0 %v547
    %582 = vmatprep.subr.bf16.mxu0 0
    %583 = vmatpush2.bf16.msra.mxu0 %v546
    %584 = vmatprep.subr.bf16.mxu0 0
    %585 = vmatpush2.bf16.msra.mxu0 %v545
    %586 = vmatprep.subr.bf16.mxu0 0
    %587 = vmatpush2.bf16.msra.mxu0 %v544
    %588 = vmatprep.subr.bf16.mxu0 0
    %589 = vmatpush2.bf16.msra.mxu0 %v543
    %590 = vmatprep.subr.bf16.mxu0 0
    %591 = vmatpush2.bf16.msra.mxu0 %v542
    %592 = vmatprep.subr.bf16.mxu0 0
    %593 = vmatpush2.bf16.msra.mxu0 %v541
    %594 = vmatprep.subr.bf16.mxu0 0
    %595 = vmatpush2.bf16.msra.mxu0 %v540
    %596 = vmatprep.mubr.bf16.mxu0 %v428
    %597 = vmatmul.mubr.bf16.gmra.mxu0 %v427
    %v598 = vpop.f32.mrf.mxu0
    %v599 = vadd.f32 %v466, %v598
    %v600 = vpop.f32.mrf.mxu0
    %v601 = vpop.f32.mrf.mxu0
    %v602 = vpop.f32.mrf.mxu0
    %603 = vdwg.mxu0
    %v604 = vmax.f32 %v599, 0.0
    %v605 = vpack.c.bf16 %v604, %v604
    %v606 = vld [vmem:[#allocation8] sm:$0xf]
    %v607 = vld [vmem:[#allocation8 + $0x4] sm:$0xf]
    %v608 = vld [vmem:[#allocation8 + $0x8] sm:$0xf]
    %v609 = vld [vmem:[#allocation8 + $0xc] sm:$0xf]
    %v610 = vld [vmem:[#allocation8 + $0x10] sm:$0xf]
    %v611 = vld [vmem:[#allocation8 + $0x14] sm:$0xf]
    %v612 = vld [vmem:[#allocation8 + $0x18] sm:$0xf]
    %v613 = vld [vmem:[#allocation8 + $0x1c] sm:$0xf]
    %v614 = vld [vmem:[#allocation8 + $0x20] sm:$0xf]
    %v615 = vld [vmem:[#allocation8 + $0x24] sm:$0xf]
    %v616 = vld [vmem:[#allocation8 + $0x28] sm:$0xf]
    %v617 = vld [vmem:[#allocation8 + $0x2c] sm:$0xf]
    %v618 = vld [vmem:[#allocation8 + $0x30] sm:$0xf]
    %v619 = vld [vmem:[#allocation8 + $0x34] sm:$0xf]
    %v620 = vld [vmem:[#allocation8 + $0x38] sm:$0xf]
    %v621 = vld [vmem:[#allocation8 + $0x3c] sm:$0xf]
    %v622 = vld [vmem:[%s8] sm:$0x1]
    %v624 = vlaneseq
    %v625 = vshrl.u32 %v624, 7
    %v626 = vsub.s32 0, %v625
    %v627 = vrot.slane %v622, %v626
    %v645 = vunpack.c.l.b16 %v606
    %v646 = vunpack.c.l.b16 %v607
    %v647 = vunpack.c.l.b16 %v608
    %v648 = vunpack.c.l.b16 %v609
    %v649 = vunpack.c.l.b16 %v610
    %v650 = vunpack.c.l.b16 %v611
    %v651 = vunpack.c.l.b16 %v612
    %v652 = vunpack.c.l.b16 %v613
    %v653 = vunpack.c.l.b16 %v614
    %v654 = vunpack.c.l.b16 %v615
    %v655 = vunpack.c.l.b16 %v616
    %v656 = vunpack.c.l.b16 %v617
    %v657 = vunpack.c.l.b16 %v618
    %v658 = vunpack.c.l.b16 %v619
    %v659 = vunpack.c.l.b16 %v620
    %v660 = vunpack.c.l.b16 %v621
    %v661 = vpack.c.b16 %v646, %v645
    %v662 = vpack.c.b16 %v648, %v647
    %v663 = vpack.c.b16 %v650, %v649
    %v664 = vpack.c.b16 %v652, %v651
    %v665 = vpack.c.b16 %v654, %v653
    %v666 = vpack.c.b16 %v656, %v655
    %v667 = vpack.c.b16 %v658, %v657
    %v668 = vpack.c.b16 %v660, %v659
    %677 = vmatprep.subr.bf16.mxu0 0
    %678 = vmatpush1.bf16.msra.mxu0 %v668
    %679 = vmatprep.subr.bf16.mxu0 0
    %680 = vmatpush1.bf16.msra.mxu0 %v667
    %681 = vmatprep.subr.bf16.mxu0 0
    %682 = vmatpush1.bf16.msra.mxu0 %v666
    %683 = vmatprep.subr.bf16.mxu0 0
    %684 = vmatpush1.bf16.msra.mxu0 %v665
    %685 = vmatprep.subr.bf16.mxu0 0
    %686 = vmatpush1.bf16.msra.mxu0 %v664
    %687 = vmatprep.subr.bf16.mxu0 0
    %688 = vmatpush1.bf16.msra.mxu0 %v663
    %689 = vmatprep.subr.bf16.mxu0 0
    %690 = vmatpush1.bf16.msra.mxu0 %v662
    %691 = vmatprep.subr.bf16.mxu0 0
    %692 = vmatpush1.bf16.msra.mxu0 %v661
    %693 = vmatprep.subr.bf16.mxu0 0
    %694 = vmatpush2.bf16.msra.mxu0 0
    %695 = vmatprep.subr.bf16.mxu0 0
    %696 = vmatpush2.bf16.msra.mxu0 0
    %697 = vmatprep.subr.bf16.mxu0 0
    %698 = vmatpush2.bf16.msra.mxu0 0
    %699 = vmatprep.subr.bf16.mxu0 0
    %700 = vmatpush2.bf16.msra.mxu0 0
    %701 = vmatprep.subr.bf16.mxu0 0
    %702 = vmatpush2.bf16.msra.mxu0 0
    %703 = vmatprep.subr.bf16.mxu0 0
    %704 = vmatpush2.bf16.msra.mxu0 0
    %705 = vmatprep.subr.bf16.mxu0 0
    %706 = vmatpush2.bf16.msra.mxu0 0
    %707 = vmatprep.subr.bf16.mxu0 0
    %708 = vmatpush2.bf16.msra.mxu0 0
    %709 = vmatprep.mubr.bf16.mxu0 0
    %710 = vmatmul.mubr.bf16.gmra.mxu0 %v605
    %v711 = vpop.f32.mrf.mxu0
    %v712 = vadd.f32 %v627, %v711
    %v713 = vpop.f32.mrf.mxu0
    %v714 = vpop.f32.mrf.mxu0
    %v715 = vpop.f32.mrf.mxu0
    %716 = vdwg.mxu0
    %v717 = vtanh.pop %v712
    %v718 = vld [vmem:[%s9] sm:$0x1]
    %v719 = vtanh.pop %v718
    %v720 = vmul.f32 %v719, 1.442695
    %v721 = vpow.pop %v720
    %v722 = vsub.f32 %v721, 0.3
    %v723 = vmul.f32 %v722, 0.5
    %v725 = vlaneseq
    %v726 = vshrl.u32 %v725, 7
    %v727 = vsub.s32 0, %v726
    %v728 = vrot.slane %v723, %v727
    %v730 = vld [vmem:[%s10] sm:$0xff]
    %v731 = vmul.f32 %v728, %v730
    %v732 = vadd.f32 %v717, %v731
    %733 = vst [vmem:[#allocation10] sm:$0xff] %v732
    %s734 = scalar_lea.vmem [#allocation10], 8
    %735 = vst [vmem:[%s734] sm:$0xff] %v717
    %s736 = scalar_lea.vmem [#allocation10], 16
    %737 = vst [vmem:[%s736] sm:$0xff] %v728
    // Predicated region
    $region62: #{actor_ppo_forward_padded.1} parent=1 // pred_check
      _
    $region63: #{actor_ppo_forward_padded.1} parent=1 // pred_check_branch
      %739 = sbr.rel (0) target = $region65
    $region64: #{actor_ppo_forward_padded.1} parent=1 // pred_region
      %s741 = ssub.s32 384, 384
      %742 = vsyncadd [#allocation4], %s741
      %s743 = sshll.u32 [#allocation10], 4
      %s744 = int_to_ptr.vmem [resolvable:$true] %s743
      %749 = dma.vmem_to_hbm [thread:$0]  %s744, 384, %s11, [#allocation4], 128, 128, 8
    $region65: #{actor_ppo_forward_padded.1} parent=1 // pred_fallthru
      _
    // Predicated region
    $region66: #{actor_ppo_forward_padded.1} parent=1 // pred_check
      _
    $region67: #{actor_ppo_forward_padded.1} parent=1 // pred_check_branch
      %751 = sbr.rel (0) target = $region69
    $region68: #{actor_ppo_forward_padded.1} parent=1 // pred_region
      %752 = dma.done [#allocation4], 384
    $region69: #{actor_ppo_forward_padded.1} parent=1 // pred_fallthru
      _
    %753 = vsyncpa [#allocation3], 1
    %754 = vsyncpa [#allocation6], 1
    %755 = vsyncpa [#allocation9], 1
    %756 = vsyncpa [#allocation4], 1

</llo_original>
